<compile_context>
chip_gen: v5e
topology: v5e:2x2
jax: 0.10.0
libtpu: 0.0.40
codegen_flags: <defaults>
</compile_context>

<pallas_src>
import functools

import jax
import jax.numpy as jnp
from jax.experimental import pallas as pl
from jax.experimental.pallas import tpu as pltpu


def _tattention_kernel(nhead, hdim, eps, batched_heads,
                       x_ref, wqkv_ref,
                       g1_ref, b1_ref, g2_ref, b2_ref,
                       wf1_ref, bf1_ref, wf2_ref, bf2_ref,
                       o_ref):
    f32 = jnp.float32
    bf16 = jnp.bfloat16

    Bb, T, D = x_ref.shape
    R = Bb * T

    # Flatten the batch block to rows; all row-wise math works on (R, D) in f32.
    x = x_ref[...].astype(f32).reshape(R, D)

    def layer_norm(z, g, b):
        # One-pass mean / E[z^2]: the two cross-lane reductions are independent,
        # shortening the serial XLU chain vs. mean -> (z - mu)^2 -> mean.
        mu = jnp.mean(z, axis=-1, keepdims=True)
        ez2 = jnp.mean(z * z, axis=-1, keepdims=True)
        var = jnp.maximum(ez2 - mu * mu, 0.0)
        return (z - mu) * jax.lax.rsqrt(var + eps) * g + b

    xn = layer_norm(x, g1_ref[...], b1_ref[...])                     # (R, D) f32
    xn_bf = xn.astype(bf16)

    # ---- fused Q|K|V projection: one MXU pass with N = 3*D ----
    qkv = jnp.dot(xn_bf, wqkv_ref[...], preferred_element_type=f32)  # (R, 3D)
    q = qkv[:, 0:D]
    k = qkv[:, D:2 * D]
    v = qkv[:, 2 * D:3 * D]

    # ---- multi-head attention (NO 1/sqrt(hdim) scaling, per the reference) ----
    if batched_heads:
        # Fold (batch, head) into batch dims: two batched matmuls, no concat.
        q4 = q.reshape(Bb, T, nhead, hdim).astype(bf16)
        k4 = k.reshape(Bb, T, nhead, hdim).astype(bf16)
        v4 = v.reshape(Bb, T, nhead, hdim).astype(bf16)
        s = jnp.einsum('bqnh,bknh->bnqk', q4, k4,
                       preferred_element_type=f32)                   # (Bb, H, T, T)
        s = s - jnp.max(s, axis=-1, keepdims=True)
        p = jnp.exp(s)
        p = p * pl.reciprocal(jnp.sum(p, axis=-1, keepdims=True), approx=True)
        att = jnp.einsum('bnqk,bknh->bqnh', p.astype(bf16), v4,
                         preferred_element_type=f32)                 # (Bb, T, H, hd)
        att = att.reshape(R, D)
    else:
        # Conservative (previously verified) per-head path.
        q3 = q.reshape(Bb, T, D)
        k3 = k.reshape(Bb, T, D)
        v3 = v.reshape(Bb, T, D)
        head_outs = []
        for i in range(nhead):
            lo = i * hdim
            qh = q3[:, :, lo:lo + hdim].astype(bf16)
            kh = k3[:, :, lo:lo + hdim].astype(bf16)
            vh = v3[:, :, lo:lo + hdim].astype(bf16)
            s = jnp.einsum('bqh,bkh->bqk', qh, kh,
                           preferred_element_type=f32)               # (Bb, T, T)
            s = s - jnp.max(s, axis=-1, keepdims=True)
            p = jnp.exp(s)
            p = p * pl.reciprocal(jnp.sum(p, axis=-1, keepdims=True), approx=True)
            oh = jnp.einsum('bqk,bkh->bqh', p.astype(bf16), vh,
                            preferred_element_type=f32)              # (Bb, T, hd)
            head_outs.append(oh.reshape(R, hdim))
        att = jnp.concatenate(head_outs, axis=-1)                    # (R, D)

    # ---- residual uses the *normalized* x (as in the reference) + LayerNorm 2 ----
    xt = layer_norm(xn + att, g2_ref[...], b2_ref[...])

    # ---- FFN: linear + bias -> ReLU -> linear + bias (dropouts = identity) ----
    h = jnp.dot(xt.astype(bf16), wf1_ref[...], preferred_element_type=f32) + bf1_ref[...]
    h = jnp.maximum(h, 0.0)
    f = jnp.dot(h.astype(bf16), wf2_ref[...], preferred_element_type=f32) + bf2_ref[...]

    out = xt + f
    o_ref[...] = out.reshape(o_ref.shape).astype(o_ref.dtype)


def _vmem_limit_bytes():
    """Generation-aware VMEM budget: ~60% of physical, clamped to [32, 96] MiB."""
    cap = 64 << 20  # conservative default (v7x per-core physical VMEM)
    try:
        cap = int(getattr(pltpu.get_tpu_info(), "vmem_capacity_bytes", cap))
    except Exception:
        pass
    return int(min(max((cap * 3) // 5, 32 << 20), 96 << 20))


def _pick_batch_block(B, T, D, nhead, *, target_rows=512):
    """Pack batch elements per step to fill the MXU M dim, bounded by VMEM use."""
    if B <= 1:
        return 1
    bb = max(1, target_rows // max(T, 1))
    # Bound the per-step attention-score working set ((Bb, nhead, T, T) f32).
    bb = min(bb, max(1, (4 << 20) // max(nhead * T * T * 4, 1)))
    # Bound the (R, D)-sized f32 temporaries (~10 live copies).
    bb = min(bb, max(1, (12 << 20) // max(T * D * 4 * 10, 1)))
    # Keep at least 2 grid steps so both v7x TensorCores get work (no cost on 1-TC chips).
    bb = min(bb, B // 2)
    bb = max(1, min(bb, B))
    while B % bb != 0:
        bb -= 1
    return bb


def tattention_forward(x, params, *, nhead, eps=1e-5, batch_block=None):
    """x: (B, T, D) float32.  params: dict of weights (see init_params)."""
    B, T, D = x.shape
    assert D % nhead == 0
    hdim = D // nhead

    bb = _pick_batch_block(B, T, D, nhead) if batch_block is None else batch_block
    assert B % bb == 0

    bf16 = jnp.bfloat16
    f32 = jnp.float32

    # Conv1d(k=1) == linear over channels.  Pre-transpose to (D_in, D_out), fuse
    # Q|K|V into one (D, 3D) matrix, and cast to bf16 so the kernel feeds the MXU
    # directly (no in-kernel transposes, half the weight DMA bytes).
    wqkv = jnp.concatenate(
        [params["wq"].T, params["wk"].T, params["wv"].T], axis=1).astype(bf16)
    wf1 = params["wf1"].T.astype(bf16)
    wf2 = params["wf2"].T.astype(bf16)

    # 1-D LayerNorm / bias params as (1, D) f32 for lane-friendly layout.
    g1 = params["g1"].reshape(1, D).astype(f32)
    b1 = params["b1"].reshape(1, D).astype(f32)
    g2 = params["g2"].reshape(1, D).astype(f32)
    b2 = params["b2"].reshape(1, D).astype(f32)
    bff1 = params["bf1"].reshape(1, D).astype(f32)
    bff2 = params["bf2"].reshape(1, D).astype(f32)

    args = (x, wqkv, g1, b1, g2, b2, wf1, bff1, wf2, bff2)

    flops = 2 * B * T * D * D * 5 + 4 * B * T * T * D
    transcendentals = B * nhead * T * T + 2 * B * T
    bytes_accessed = 2 * B * T * D * 4 + 5 * D * D * 2 + 6 * D * 4
    vmem_limit = _vmem_limit_bytes()

    def build(batched_heads, single_buffer_weights):
        if single_buffer_weights:
            # Grid-invariant blocks are never re-fetched; don't reserve a 2nd buffer.
            rep = lambda shape: pl.BlockSpec(shape, lambda b: (0, 0),
                                             pipeline_mode=pl.Buffered(1))
        else:
            rep = lambda shape: pl.BlockSpec(shape, lambda b: (0, 0))

        kernel = functools.partial(_tattention_kernel, nhead, hdim, eps, batched_heads)
        return pl.pallas_call(
            kernel,
            out_shape=jax.ShapeDtypeStruct((B, T, D), x.dtype),
            grid_spec=pltpu.PrefetchScalarGridSpec(
                num_scalar_prefetch=0,
                grid=(B // bb,),
                in_specs=[
                    pl.BlockSpec((bb, T, D), lambda b: (b, 0, 0)),  # x
                    rep((D, 3 * D)),                                # Wq|Wk|Wv
                    rep((1, D)), rep((1, D)),                       # gamma1, beta1
                    rep((1, D)), rep((1, D)),                       # gamma2, beta2
                    rep((D, D)), rep((1, D)),                       # W ffn1, b ffn1
                    rep((D, D)), rep((1, D)),                       # W ffn2, b ffn2
                ],
                out_specs=pl.BlockSpec((bb, T, D), lambda b: (b, 0, 0)),
            ),
            compiler_params=pltpu.CompilerParams(
                dimension_semantics=("parallel",),
                vmem_limit_bytes=vmem_limit,
            ),
            cost_estimate=pl.CostEstimate(
                flops=int(flops),
                transcendentals=int(transcendentals),
                bytes_accessed=int(bytes_accessed),
            ),
        )

    # Preferred config first; fall back to the conservative, previously verified
    # lowering if a feature is unsupported on the running jax/libtpu combination.
    configs = ((True, True), (True, False), (False, False))
    last_err = None
    for batched_heads, single_buffer_weights in configs:
        try:
            return build(batched_heads, single_buffer_weights)(*args)
        except Exception as e:  # retry with a safer lowering configuration
            last_err = e
    raise last_err


def init_params(key, d_model):
    """Deterministic synthetic parameters matching the PyTorch module shapes.

    Conv1d(d, d, kernel_size=1) weight is (d_out, d_in, 1); we store the squeezed
    (d_out, d_in) matrix and apply it as x @ W^T (wrapper pre-transposes/fuses).
    """
    ks = jax.random.split(key, 5)
    scale = 1.0 / jnp.sqrt(d_model)
    return {
        "wq": jax.random.uniform(ks[0], (d_model, d_model), jnp.float32, -scale, scale),
        "wk": jax.random.uniform(ks[1], (d_model, d_model), jnp.float32, -scale, scale),
        "wv": jax.random.uniform(ks[2], (d_model, d_model), jnp.float32, -scale, scale),
        "g1": jnp.ones((d_model,), jnp.float32),
        "b1": jnp.zeros((d_model,), jnp.float32),
        "g2": jnp.ones((d_model,), jnp.float32),
        "b2": jnp.zeros((d_model,), jnp.float32),
        "wf1": jax.random.uniform(ks[3], (d_model, d_model), jnp.float32, -scale, scale),
        "bf1": jnp.zeros((d_model,), jnp.float32),
        "wf2": jax.random.uniform(ks[4], (d_model, d_model), jnp.float32, -scale, scale),
        "bf2": jnp.zeros((d_model,), jnp.float32),
    }


def reference_forward(x, params, *, nhead, eps=1e-5):
    """Pure-JAX f32 reference mirroring the PyTorch forward (eval mode)."""
    D = x.shape[-1]
    hdim = D // nhead

    def ln(z, g, b):
        mu = jnp.mean(z, axis=-1, keepdims=True)
        var = jnp.mean((z - mu) ** 2, axis=-1, keepdims=True)
        return (z - mu) / jnp.sqrt(var + eps) * g + b

    xn = ln(x, params["g1"], params["b1"])
    q = xn @ params["wq"].T
    k = xn @ params["wk"].T
    v = xn @ params["wv"].T
    outs = []
    for i in range(nhead):
        qh = q[..., i * hdim:(i + 1) * hdim]
        kh = k[..., i * hdim:(i + 1) * hdim]
        vh = v[..., i * hdim:(i + 1) * hdim]
        s = jnp.einsum("btd,bsd->bts", qh, kh)
        p = jax.nn.softmax(s, axis=-1)
        outs.append(jnp.einsum("bts,bsd->btd", p, vh))
    att = jnp.concatenate(outs, axis=-1)
    xt = ln(xn + att, params["g2"], params["b2"])
    h = jnp.maximum(xt @ params["wf1"].T + params["bf1"], 0.0)
    f = h @ params["wf2"].T + params["bf2"]
    return xt + f


if __name__ == "__main__":
    B, T, D, NHEAD = 2, 8, 32, 4

    key = jax.random.PRNGKey(0)
    kx, kp = jax.random.split(key)
    x = jax.random.normal(kx, (B, T, D), jnp.float32)
    params = init_params(kp, D)

    out = tattention_forward(x, params, nhead=NHEAD)
    out = jax.block_until_ready(out)

    ref = reference_forward(x, params, nhead=NHEAD)
    assert out.shape == (B, T, D)
    # bf16 MXU operands with f32 accumulation -> compare with a bf16-level tolerance.
    assert jnp.allclose(out, ref, atol=5e-2, rtol=5e-2), (
        "mismatch vs JAX reference; max abs diff = %s" % jnp.max(jnp.abs(out - ref)))

    print("KERNEL_OK")
</pallas_src>

<mosaic_0001>
module attributes {stable_mosaic.version = 11 : i64} {
  func.func @_tattention_kernel(%arg0: i32, %arg1: memref<1x8x32xf32, #tpu.memory_space<vmem>>, %arg2: memref<32x96xbf16, #tpu.memory_space<vmem>>, %arg3: memref<1x32xf32, #tpu.memory_space<vmem>>, %arg4: memref<1x32xf32, #tpu.memory_space<vmem>>, %arg5: memref<1x32xf32, #tpu.memory_space<vmem>>, %arg6: memref<1x32xf32, #tpu.memory_space<vmem>>, %arg7: memref<32x32xbf16, #tpu.memory_space<vmem>>, %arg8: memref<1x32xf32, #tpu.memory_space<vmem>>, %arg9: memref<32x32xbf16, #tpu.memory_space<vmem>>, %arg10: memref<1x32xf32, #tpu.memory_space<vmem>>, %arg11: memref<1x8x32xf32, #tpu.memory_space<vmem>>) attributes {dimension_semantics = [#tpu.dimension_semantics<parallel>], iteration_bounds = array<i64: 2>, scalar_prefetch = 0 : i64, scratch_operands = 0 : i64, tpu.core_type = #tpu.core_type<tc>, window_params = [{transform_indices = @transform_0, window_bounds = array<i64: 1, 8, 32>}, {pipeline_mode = #tpu.pipeline_mode<synchronous>, transform_indices = @transform_1, window_bounds = array<i64: 32, 96>}, {pipeline_mode = #tpu.pipeline_mode<synchronous>, transform_indices = @transform_2, window_bounds = array<i64: 1, 32>}, {pipeline_mode = #tpu.pipeline_mode<synchronous>, transform_indices = @transform_3, window_bounds = array<i64: 1, 32>}, {pipeline_mode = #tpu.pipeline_mode<synchronous>, transform_indices = @transform_4, window_bounds = array<i64: 1, 32>}, {pipeline_mode = #tpu.pipeline_mode<synchronous>, transform_indices = @transform_5, window_bounds = array<i64: 1, 32>}, {pipeline_mode = #tpu.pipeline_mode<synchronous>, transform_indices = @transform_6, window_bounds = array<i64: 32, 32>}, {pipeline_mode = #tpu.pipeline_mode<synchronous>, transform_indices = @transform_7, window_bounds = array<i64: 1, 32>}, {pipeline_mode = #tpu.pipeline_mode<synchronous>, transform_indices = @transform_8, window_bounds = array<i64: 32, 32>}, {pipeline_mode = #tpu.pipeline_mode<synchronous>, transform_indices = @transform_9, window_bounds = array<i64: 1, 32>}, {transform_indices = @transform_10, window_bounds = array<i64: 1, 8, 32>}]} {
    %c0 = arith.constant 0 : index
    %c0_0 = arith.constant 0 : index
    %c0_1 = arith.constant 0 : index
    %0 = vector.load %arg1[%c0, %c0_0, %c0_1] : memref<1x8x32xf32, #tpu.memory_space<vmem>>, vector<1x8x32xf32>
    %1 = vector.shape_cast %0 : vector<1x8x32xf32> to vector<8x32xf32>
    %c0_2 = arith.constant 0 : index
    %c0_3 = arith.constant 0 : index
    %2 = vector.load %arg3[%c0_2, %c0_3] : memref<1x32xf32, #tpu.memory_space<vmem>>, vector<1x32xf32>
    %c0_4 = arith.constant 0 : index
    %c0_5 = arith.constant 0 : index
    %3 = vector.load %arg4[%c0_4, %c0_5] : memref<1x32xf32, #tpu.memory_space<vmem>>, vector<1x32xf32>
    %cst = arith.constant dense<0.000000e+00> : vector<8xf32>
    %4 = vector.multi_reduction <add>, %1, %cst [1] : vector<8x32xf32> to vector<8xf32>
    %5 = vector.shape_cast %4 : vector<8xf32> to vector<8x1xf32>
    %cst_6 = arith.constant 3.200000e+01 : f32
    %6 = vector.broadcast %cst_6 : f32 to vector<8x1xf32>
    %7 = arith.divf %5, %6 : vector<8x1xf32>
    %8 = arith.mulf %1, %1 : vector<8x32xf32>
    %cst_7 = arith.constant dense<0.000000e+00> : vector<8xf32>
    %9 = vector.multi_reduction <add>, %8, %cst_7 [1] : vector<8x32xf32> to vector<8xf32>
    %10 = vector.shape_cast %9 : vector<8xf32> to vector<8x1xf32>
    %cst_8 = arith.constant 3.200000e+01 : f32
    %11 = vector.broadcast %cst_8 : f32 to vector<8x1xf32>
    %12 = arith.divf %10, %11 : vector<8x1xf32>
    %13 = arith.mulf %7, %7 : vector<8x1xf32>
    %14 = arith.subf %12, %13 : vector<8x1xf32>
    %cst_9 = arith.constant 0.000000e+00 : f32
    %15 = vector.broadcast %cst_9 : f32 to vector<8x1xf32>
    %16 = arith.maximumf %14, %15 : vector<8x1xf32>
    %17 = vector.broadcast %7 : vector<8x1xf32> to vector<8x32xf32>
    %18 = arith.subf %1, %17 : vector<8x32xf32>
    %cst_10 = arith.constant 9.99999974E-6 : f32
    %19 = vector.broadcast %cst_10 : f32 to vector<8x1xf32>
    %20 = arith.addf %16, %19 : vector<8x1xf32>
    %21 = math.rsqrt %20 : vector<8x1xf32>
    %22 = vector.broadcast %21 : vector<8x1xf32> to vector<8x32xf32>
    %23 = arith.mulf %18, %22 : vector<8x32xf32>
    %24 = vector.broadcast %2 : vector<1x32xf32> to vector<8x32xf32>
    %25 = arith.mulf %23, %24 : vector<8x32xf32>
    %26 = vector.broadcast %3 : vector<1x32xf32> to vector<8x32xf32>
    %27 = arith.addf %25, %26 : vector<8x32xf32>
    %28 = arith.truncf %27 : vector<8x32xf32> to vector<8x32xbf16>
    %c0_11 = arith.constant 0 : index
    %c0_12 = arith.constant 0 : index
    %29 = vector.load %arg2[%c0_11, %c0_12] : memref<32x96xbf16, #tpu.memory_space<vmem>>, vector<32x96xbf16>
    %cst_13 = arith.constant dense<0.000000e+00> : vector<8x96xf32>
    %30 = tpu.matmul %28, %29, %cst_13 {dimension_numbers = #tpu.dot_dimension_numbers<[1], [0], [0], [1], [0, 0, 1, 1], [], []>} : vector<8x32xbf16>, vector<32x96xbf16>, vector<8x96xf32> -> vector<8x96xf32>
    %31 = vector.extract_strided_slice %30 {offsets = [0, 0], sizes = [8, 32], strides = [1, 1]} : vector<8x96xf32> to vector<8x32xf32>
    %32 = vector.extract_strided_slice %30 {offsets = [0, 32], sizes = [8, 32], strides = [1, 1]} : vector<8x96xf32> to vector<8x32xf32>
    %33 = vector.extract_strided_slice %30 {offsets = [0, 64], sizes = [8, 32], strides = [1, 1]} : vector<8x96xf32> to vector<8x32xf32>
    %34 = vector.shape_cast %31 : vector<8x32xf32> to vector<1x8x32xf32>
    %35 = vector.shape_cast %32 : vector<8x32xf32> to vector<1x8x32xf32>
    %36 = vector.shape_cast %33 : vector<8x32xf32> to vector<1x8x32xf32>
    %37 = vector.extract_strided_slice %34 {offsets = [0, 0, 0], sizes = [1, 8, 8], strides = [1, 1, 1]} : vector<1x8x32xf32> to vector<1x8x8xf32>
    %38 = arith.truncf %37 : vector<1x8x8xf32> to vector<1x8x8xbf16>
    %39 = vector.extract_strided_slice %35 {offsets = [0, 0, 0], sizes = [1, 8, 8], strides = [1, 1, 1]} : vector<1x8x32xf32> to vector<1x8x8xf32>
    %40 = arith.truncf %39 : vector<1x8x8xf32> to vector<1x8x8xbf16>
    %41 = vector.extract_strided_slice %36 {offsets = [0, 0, 0], sizes = [1, 8, 8], strides = [1, 1, 1]} : vector<1x8x32xf32> to vector<1x8x8xf32>
    %42 = arith.truncf %41 : vector<1x8x8xf32> to vector<1x8x8xbf16>
    "tpu.trace_start"() <{level = 10 : i32, message = "bqh,bkh->bqk"}> : () -> ()
    %cst_14 = arith.constant dense<0.000000e+00> : vector<1x8x8xf32>
    %43 = tpu.matmul %38, %40, %cst_14 {dimension_numbers = #tpu.dot_dimension_numbers<[2], [2], [1], [1], [0, 0, 0, 1, 1, 1], [0], [0]>} : vector<1x8x8xbf16>, vector<1x8x8xbf16>, vector<1x8x8xf32> -> vector<1x8x8xf32>
    "tpu.trace_stop"() : () -> ()
    %cst_15 = arith.constant dense<0xFF800000> : vector<1x8xf32>
    %44 = vector.multi_reduction <maximumf>, %43, %cst_15 [2] : vector<1x8x8xf32> to vector<1x8xf32>
    %45 = vector.shape_cast %44 : vector<1x8xf32> to vector<1x8x1xf32>
    %46 = vector.broadcast %45 : vector<1x8x1xf32> to vector<1x8x8xf32>
    %47 = arith.subf %43, %46 : vector<1x8x8xf32>
    %48 = math.exp %47 : vector<1x8x8xf32>
    %cst_16 = arith.constant dense<0.000000e+00> : vector<1x8xf32>
    %49 = vector.multi_reduction <add>, %48, %cst_16 [2] : vector<1x8x8xf32> to vector<1x8xf32>
    %50 = vector.shape_cast %49 : vector<1x8xf32> to vector<1x8x1xf32>
    %51 = tpu.reciprocal %50 {approx = true} : vector<1x8x1xf32> -> vector<1x8x1xf32>
    %52 = vector.broadcast %51 : vector<1x8x1xf32> to vector<1x8x8xf32>
    %53 = arith.mulf %48, %52 : vector<1x8x8xf32>
    %54 = arith.truncf %53 : vector<1x8x8xf32> to vector<1x8x8xbf16>
    "tpu.trace_start"() <{level = 10 : i32, message = "bqk,bkh->bqh"}> : () -> ()
    %cst_17 = arith.constant dense<0.000000e+00> : vector<1x8x8xf32>
    %55 = tpu.matmul %54, %42, %cst_17 {dimension_numbers = #tpu.dot_dimension_numbers<[2], [1], [1], [2], [0, 0, 0, 1, 1, 2], [0], [0]>} : vector<1x8x8xbf16>, vector<1x8x8xbf16>, vector<1x8x8xf32> -> vector<1x8x8xf32>
    "tpu.trace_stop"() : () -> ()
    %56 = vector.shape_cast %55 : vector<1x8x8xf32> to vector<8x8xf32>
    %57 = vector.extract_strided_slice %34 {offsets = [0, 0, 8], sizes = [1, 8, 8], strides = [1, 1, 1]} : vector<1x8x32xf32> to vector<1x8x8xf32>
    %58 = arith.truncf %57 : vector<1x8x8xf32> to vector<1x8x8xbf16>
    %59 = vector.extract_strided_slice %35 {offsets = [0, 0, 8], sizes = [1, 8, 8], strides = [1, 1, 1]} : vector<1x8x32xf32> to vector<1x8x8xf32>
    %60 = arith.truncf %59 : vector<1x8x8xf32> to vector<1x8x8xbf16>
    %61 = vector.extract_strided_slice %36 {offsets = [0, 0, 8], sizes = [1, 8, 8], strides = [1, 1, 1]} : vector<1x8x32xf32> to vector<1x8x8xf32>
    %62 = arith.truncf %61 : vector<1x8x8xf32> to vector<1x8x8xbf16>
    "tpu.trace_start"() <{level = 10 : i32, message = "bqh,bkh->bqk"}> : () -> ()
    %cst_18 = arith.constant dense<0.000000e+00> : vector<1x8x8xf32>
    %63 = tpu.matmul %58, %60, %cst_18 {dimension_numbers = #tpu.dot_dimension_numbers<[2], [2], [1], [1], [0, 0, 0, 1, 1, 1], [0], [0]>} : vector<1x8x8xbf16>, vector<1x8x8xbf16>, vector<1x8x8xf32> -> vector<1x8x8xf32>
    "tpu.trace_stop"() : () -> ()
    %cst_19 = arith.constant dense<0xFF800000> : vector<1x8xf32>
    %64 = vector.multi_reduction <maximumf>, %63, %cst_19 [2] : vector<1x8x8xf32> to vector<1x8xf32>
    %65 = vector.shape_cast %64 : vector<1x8xf32> to vector<1x8x1xf32>
    %66 = vector.broadcast %65 : vector<1x8x1xf32> to vector<1x8x8xf32>
    %67 = arith.subf %63, %66 : vector<1x8x8xf32>
    %68 = math.exp %67 : vector<1x8x8xf32>
    %cst_20 = arith.constant dense<0.000000e+00> : vector<1x8xf32>
    %69 = vector.multi_reduction <add>, %68, %cst_20 [2] : vector<1x8x8xf32> to vector<1x8xf32>
    %70 = vector.shape_cast %69 : vector<1x8xf32> to vector<1x8x1xf32>
    %71 = tpu.reciprocal %70 {approx = true} : vector<1x8x1xf32> -> vector<1x8x1xf32>
    %72 = vector.broadcast %71 : vector<1x8x1xf32> to vector<1x8x8xf32>
    %73 = arith.mulf %68, %72 : vector<1x8x8xf32>
    %74 = arith.truncf %73 : vector<1x8x8xf32> to vector<1x8x8xbf16>
    "tpu.trace_start"() <{level = 10 : i32, message = "bqk,bkh->bqh"}> : () -> ()
    %cst_21 = arith.constant dense<0.000000e+00> : vector<1x8x8xf32>
    %75 = tpu.matmul %74, %62, %cst_21 {dimension_numbers = #tpu.dot_dimension_numbers<[2], [1], [1], [2], [0, 0, 0, 1, 1, 2], [0], [0]>} : vector<1x8x8xbf16>, vector<1x8x8xbf16>, vector<1x8x8xf32> -> vector<1x8x8xf32>
    "tpu.trace_stop"() : () -> ()
    %76 = vector.shape_cast %75 : vector<1x8x8xf32> to vector<8x8xf32>
    %77 = vector.extract_strided_slice %34 {offsets = [0, 0, 16], sizes = [1, 8, 8], strides = [1, 1, 1]} : vector<1x8x32xf32> to vector<1x8x8xf32>
    %78 = arith.truncf %77 : vector<1x8x8xf32> to vector<1x8x8xbf16>
    %79 = vector.extract_strided_slice %35 {offsets = [0, 0, 16], sizes = [1, 8, 8], strides = [1, 1, 1]} : vector<1x8x32xf32> to vector<1x8x8xf32>
    %80 = arith.truncf %79 : vector<1x8x8xf32> to vector<1x8x8xbf16>
    %81 = vector.extract_strided_slice %36 {offsets = [0, 0, 16], sizes = [1, 8, 8], strides = [1, 1, 1]} : vector<1x8x32xf32> to vector<1x8x8xf32>
    %82 = arith.truncf %81 : vector<1x8x8xf32> to vector<1x8x8xbf16>
    "tpu.trace_start"() <{level = 10 : i32, message = "bqh,bkh->bqk"}> : () -> ()
    %cst_22 = arith.constant dense<0.000000e+00> : vector<1x8x8xf32>
    %83 = tpu.matmul %78, %80, %cst_22 {dimension_numbers = #tpu.dot_dimension_numbers<[2], [2], [1], [1], [0, 0, 0, 1, 1, 1], [0], [0]>} : vector<1x8x8xbf16>, vector<1x8x8xbf16>, vector<1x8x8xf32> -> vector<1x8x8xf32>
    "tpu.trace_stop"() : () -> ()
    %cst_23 = arith.constant dense<0xFF800000> : vector<1x8xf32>
    %84 = vector.multi_reduction <maximumf>, %83, %cst_23 [2] : vector<1x8x8xf32> to vector<1x8xf32>
    %85 = vector.shape_cast %84 : vector<1x8xf32> to vector<1x8x1xf32>
    %86 = vector.broadcast %85 : vector<1x8x1xf32> to vector<1x8x8xf32>
    %87 = arith.subf %83, %86 : vector<1x8x8xf32>
    %88 = math.exp %87 : vector<1x8x8xf32>
    %cst_24 = arith.constant dense<0.000000e+00> : vector<1x8xf32>
    %89 = vector.multi_reduction <add>, %88, %cst_24 [2] : vector<1x8x8xf32> to vector<1x8xf32>
    %90 = vector.shape_cast %89 : vector<1x8xf32> to vector<1x8x1xf32>
    %91 = tpu.reciprocal %90 {approx = true} : vector<1x8x1xf32> -> vector<1x8x1xf32>
    %92 = vector.broadcast %91 : vector<1x8x1xf32> to vector<1x8x8xf32>
    %93 = arith.mulf %88, %92 : vector<1x8x8xf32>
    %94 = arith.truncf %93 : vector<1x8x8xf32> to vector<1x8x8xbf16>
    "tpu.trace_start"() <{level = 10 : i32, message = "bqk,bkh->bqh"}> : () -> ()
    %cst_25 = arith.constant dense<0.000000e+00> : vector<1x8x8xf32>
    %95 = tpu.matmul %94, %82, %cst_25 {dimension_numbers = #tpu.dot_dimension_numbers<[2], [1], [1], [2], [0, 0, 0, 1, 1, 2], [0], [0]>} : vector<1x8x8xbf16>, vector<1x8x8xbf16>, vector<1x8x8xf32> -> vector<1x8x8xf32>
    "tpu.trace_stop"() : () -> ()
    %96 = vector.shape_cast %95 : vector<1x8x8xf32> to vector<8x8xf32>
    %97 = vector.extract_strided_slice %34 {offsets = [0, 0, 24], sizes = [1, 8, 8], strides = [1, 1, 1]} : vector<1x8x32xf32> to vector<1x8x8xf32>
    %98 = arith.truncf %97 : vector<1x8x8xf32> to vector<1x8x8xbf16>
    %99 = vector.extract_strided_slice %35 {offsets = [0, 0, 24], sizes = [1, 8, 8], strides = [1, 1, 1]} : vector<1x8x32xf32> to vector<1x8x8xf32>
    %100 = arith.truncf %99 : vector<1x8x8xf32> to vector<1x8x8xbf16>
    %101 = vector.extract_strided_slice %36 {offsets = [0, 0, 24], sizes = [1, 8, 8], strides = [1, 1, 1]} : vector<1x8x32xf32> to vector<1x8x8xf32>
    %102 = arith.truncf %101 : vector<1x8x8xf32> to vector<1x8x8xbf16>
    "tpu.trace_start"() <{level = 10 : i32, message = "bqh,bkh->bqk"}> : () -> ()
    %cst_26 = arith.constant dense<0.000000e+00> : vector<1x8x8xf32>
    %103 = tpu.matmul %98, %100, %cst_26 {dimension_numbers = #tpu.dot_dimension_numbers<[2], [2], [1], [1], [0, 0, 0, 1, 1, 1], [0], [0]>} : vector<1x8x8xbf16>, vector<1x8x8xbf16>, vector<1x8x8xf32> -> vector<1x8x8xf32>
    "tpu.trace_stop"() : () -> ()
    %cst_27 = arith.constant dense<0xFF800000> : vector<1x8xf32>
    %104 = vector.multi_reduction <maximumf>, %103, %cst_27 [2] : vector<1x8x8xf32> to vector<1x8xf32>
    %105 = vector.shape_cast %104 : vector<1x8xf32> to vector<1x8x1xf32>
    %106 = vector.broadcast %105 : vector<1x8x1xf32> to vector<1x8x8xf32>
    %107 = arith.subf %103, %106 : vector<1x8x8xf32>
    %108 = math.exp %107 : vector<1x8x8xf32>
    %cst_28 = arith.constant dense<0.000000e+00> : vector<1x8xf32>
    %109 = vector.multi_reduction <add>, %108, %cst_28 [2] : vector<1x8x8xf32> to vector<1x8xf32>
    %110 = vector.shape_cast %109 : vector<1x8xf32> to vector<1x8x1xf32>
    %111 = tpu.reciprocal %110 {approx = true} : vector<1x8x1xf32> -> vector<1x8x1xf32>
    %112 = vector.broadcast %111 : vector<1x8x1xf32> to vector<1x8x8xf32>
    %113 = arith.mulf %108, %112 : vector<1x8x8xf32>
    %114 = arith.truncf %113 : vector<1x8x8xf32> to vector<1x8x8xbf16>
    "tpu.trace_start"() <{level = 10 : i32, message = "bqk,bkh->bqh"}> : () -> ()
    %cst_29 = arith.constant dense<0.000000e+00> : vector<1x8x8xf32>
    %115 = tpu.matmul %114, %102, %cst_29 {dimension_numbers = #tpu.dot_dimension_numbers<[2], [1], [1], [2], [0, 0, 0, 1, 1, 2], [0], [0]>} : vector<1x8x8xbf16>, vector<1x8x8xbf16>, vector<1x8x8xf32> -> vector<1x8x8xf32>
    "tpu.trace_stop"() : () -> ()
    %116 = vector.shape_cast %115 : vector<1x8x8xf32> to vector<8x8xf32>
    %117 = tpu.concatenate %56, %76, %96, %116 in 1 : vector<8x8xf32>, vector<8x8xf32>, vector<8x8xf32>, vector<8x8xf32> -> vector<8x32xf32>
    %118 = arith.addf %27, %117 : vector<8x32xf32>
    %c0_30 = arith.constant 0 : index
    %c0_31 = arith.constant 0 : index
    %119 = vector.load %arg5[%c0_30, %c0_31] : memref<1x32xf32, #tpu.memory_space<vmem>>, vector<1x32xf32>
    %c0_32 = arith.constant 0 : index
    %c0_33 = arith.constant 0 : index
    %120 = vector.load %arg6[%c0_32, %c0_33] : memref<1x32xf32, #tpu.memory_space<vmem>>, vector<1x32xf32>
    %cst_34 = arith.constant dense<0.000000e+00> : vector<8xf32>
    %121 = vector.multi_reduction <add>, %118, %cst_34 [1] : vector<8x32xf32> to vector<8xf32>
    %122 = vector.shape_cast %121 : vector<8xf32> to vector<8x1xf32>
    %cst_35 = arith.constant 3.200000e+01 : f32
    %123 = vector.broadcast %cst_35 : f32 to vector<8x1xf32>
    %124 = arith.divf %122, %123 : vector<8x1xf32>
    %125 = arith.mulf %118, %118 : vector<8x32xf32>
    %cst_36 = arith.constant dense<0.000000e+00> : vector<8xf32>
    %126 = vector.multi_reduction <add>, %125, %cst_36 [1] : vector<8x32xf32> to vector<8xf32>
    %127 = vector.shape_cast %126 : vector<8xf32> to vector<8x1xf32>
    %cst_37 = arith.constant 3.200000e+01 : f32
    %128 = vector.broadcast %cst_37 : f32 to vector<8x1xf32>
    %129 = arith.divf %127, %128 : vector<8x1xf32>
    %130 = arith.mulf %124, %124 : vector<8x1xf32>
    %131 = arith.subf %129, %130 : vector<8x1xf32>
    %cst_38 = arith.constant 0.000000e+00 : f32
    %132 = vector.broadcast %cst_38 : f32 to vector<8x1xf32>
    %133 = arith.maximumf %131, %132 : vector<8x1xf32>
    %134 = vector.broadcast %124 : vector<8x1xf32> to vector<8x32xf32>
    %135 = arith.subf %118, %134 : vector<8x32xf32>
    %cst_39 = arith.constant 9.99999974E-6 : f32
    %136 = vector.broadcast %cst_39 : f32 to vector<8x1xf32>
    %137 = arith.addf %133, %136 : vector<8x1xf32>
    %138 = math.rsqrt %137 : vector<8x1xf32>
    %139 = vector.broadcast %138 : vector<8x1xf32> to vector<8x32xf32>
    %140 = arith.mulf %135, %139 : vector<8x32xf32>
    %141 = vector.broadcast %119 : vector<1x32xf32> to vector<8x32xf32>
    %142 = arith.mulf %140, %141 : vector<8x32xf32>
    %143 = vector.broadcast %120 : vector<1x32xf32> to vector<8x32xf32>
    %144 = arith.addf %142, %143 : vector<8x32xf32>
    %145 = arith.truncf %144 : vector<8x32xf32> to vector<8x32xbf16>
    %c0_40 = arith.constant 0 : index
    %c0_41 = arith.constant 0 : index
    %146 = vector.load %arg7[%c0_40, %c0_41] : memref<32x32xbf16, #tpu.memory_space<vmem>>, vector<32x32xbf16>
    %cst_42 = arith.constant dense<0.000000e+00> : vector<8x32xf32>
    %147 = tpu.matmul %145, %146, %cst_42 {dimension_numbers = #tpu.dot_dimension_numbers<[1], [0], [0], [1], [0, 0, 1, 1], [], []>} : vector<8x32xbf16>, vector<32x32xbf16>, vector<8x32xf32> -> vector<8x32xf32>
    %c0_43 = arith.constant 0 : index
    %c0_44 = arith.constant 0 : index
    %148 = vector.load %arg8[%c0_43, %c0_44] : memref<1x32xf32, #tpu.memory_space<vmem>>, vector<1x32xf32>
    %149 = vector.broadcast %148 : vector<1x32xf32> to vector<8x32xf32>
    %150 = arith.addf %147, %149 : vector<8x32xf32>
    %cst_45 = arith.constant 0.000000e+00 : f32
    %151 = vector.broadcast %cst_45 : f32 to vector<8x32xf32>
    %152 = arith.maximumf %150, %151 : vector<8x32xf32>
    %153 = arith.truncf %152 : vector<8x32xf32> to vector<8x32xbf16>
    %c0_46 = arith.constant 0 : index
    %c0_47 = arith.constant 0 : index
    %154 = vector.load %arg9[%c0_46, %c0_47] : memref<32x32xbf16, #tpu.memory_space<vmem>>, vector<32x32xbf16>
    %cst_48 = arith.constant dense<0.000000e+00> : vector<8x32xf32>
    %155 = tpu.matmul %153, %154, %cst_48 {dimension_numbers = #tpu.dot_dimension_numbers<[1], [0], [0], [1], [0, 0, 1, 1], [], []>} : vector<8x32xbf16>, vector<32x32xbf16>, vector<8x32xf32> -> vector<8x32xf32>
    %c0_49 = arith.constant 0 : index
    %c0_50 = arith.constant 0 : index
    %156 = vector.load %arg10[%c0_49, %c0_50] : memref<1x32xf32, #tpu.memory_space<vmem>>, vector<1x32xf32>
    %157 = vector.broadcast %156 : vector<1x32xf32> to vector<8x32xf32>
    %158 = arith.addf %155, %157 : vector<8x32xf32>
    %159 = arith.addf %144, %158 : vector<8x32xf32>
    %160 = vector.shape_cast %159 : vector<8x32xf32> to vector<1x8x32xf32>
    %c0_51 = arith.constant 0 : index
    %c0_52 = arith.constant 0 : index
    %c0_53 = arith.constant 0 : index
    %161 = vector.load %arg11[%c0_51, %c0_52, %c0_53] : memref<1x8x32xf32, #tpu.memory_space<vmem>>, vector<1x8x32xf32>
    tpu.vector_store %arg11[%c0_51, %c0_52, %c0_53], %160 {strides = array<i32>} : memref<1x8x32xf32, #tpu.memory_space<vmem>>, vector<1x8x32xf32>,
    return
  }
  func.func @transform_0(%arg0: i32) -> (i32, i32, i32) {
    %c0_i32 = arith.constant 0 : i32
    %c0_i32_0 = arith.constant 0 : i32
    %c0_i32_1 = arith.constant 0 : i32
    return %arg0, %c0_i32, %c0_i32_0 : i32, i32, i32
  }
  func.func @transform_1(%arg0: i32) -> (i32, i32) {
    %c0_i32 = arith.constant 0 : i32
    %c0_i32_0 = arith.constant 0 : i32
    %c0_i32_1 = arith.constant 0 : i32
    return %c0_i32, %c0_i32_0 : i32, i32
  }
  func.func @transform_2(%arg0: i32) -> (i32, i32) {
    %c0_i32 = arith.constant 0 : i32
    %c0_i32_0 = arith.constant 0 : i32
    %c0_i32_1 = arith.constant 0 : i32
    return %c0_i32, %c0_i32_0 : i32, i32
  }
  func.func @transform_3(%arg0: i32) -> (i32, i32) {
    %c0_i32 = arith.constant 0 : i32
    %c0_i32_0 = arith.constant 0 : i32
    %c0_i32_1 = arith.constant 0 : i32
    return %c0_i32, %c0_i32_0 : i32, i32
  }
  func.func @transform_4(%arg0: i32) -> (i32, i32) {
    %c0_i32 = arith.constant 0 : i32
    %c0_i32_0 = arith.constant 0 : i32
    %c0_i32_1 = arith.constant 0 : i32
    return %c0_i32, %c0_i32_0 : i32, i32
  }
  func.func @transform_5(%arg0: i32) -> (i32, i32) {
    %c0_i32 = arith.constant 0 : i32
    %c0_i32_0 = arith.constant 0 : i32
    %c0_i32_1 = arith.constant 0 : i32
    return %c0_i32, %c0_i32_0 : i32, i32
  }
  func.func @transform_6(%arg0: i32) -> (i32, i32) {
    %c0_i32 = arith.constant 0 : i32
    %c0_i32_0 = arith.constant 0 : i32
    %c0_i32_1 = arith.constant 0 : i32
    return %c0_i32, %c0_i32_0 : i32, i32
  }
  func.func @transform_7(%arg0: i32) -> (i32, i32) {
    %c0_i32 = arith.constant 0 : i32
    %c0_i32_0 = arith.constant 0 : i32
    %c0_i32_1 = arith.constant 0 : i32
    return %c0_i32, %c0_i32_0 : i32, i32
  }
  func.func @transform_8(%arg0: i32) -> (i32, i32) {
    %c0_i32 = arith.constant 0 : i32
    %c0_i32_0 = arith.constant 0 : i32
    %c0_i32_1 = arith.constant 0 : i32
    return %c0_i32, %c0_i32_0 : i32, i32
  }
  func.func @transform_9(%arg0: i32) -> (i32, i32) {
    %c0_i32 = arith.constant 0 : i32
    %c0_i32_0 = arith.constant 0 : i32
    %c0_i32_1 = arith.constant 0 : i32
    return %c0_i32, %c0_i32_0 : i32, i32
  }
  func.func @transform_10(%arg0: i32) -> (i32, i32, i32) {
    %c0_i32 = arith.constant 0 : i32
    %c0_i32_0 = arith.constant 0 : i32
    %c0_i32_1 = arith.constant 0 : i32
    return %arg0, %c0_i32, %c0_i32_0 : i32, i32, i32
  }
}

</mosaic_0001>

<llo_original>
// kernel: tpu_custom_call.1
$region0: #{tpu_custom_call.1}
  #allocation0 [shape = 'u32[]', space=smem, size = 0x4, offset = 0x4, fixed_abs, tag = 'smem constant byte address 0x4 - core index']
  #allocation1 [shape = 'u32[72,128]{1,0:T(1,128)}', space=vmem, size = 0x9000, scoped, tag = 'internal scratch']
  %s0 = inlined_call_operand.hbm [shape: f32[2,8,32], index: 0, kind: input, shape index: {}]
  %s1 = inlined_call_operand.hbm [shape: bf16[32,96], index: 1, kind: input, shape index: {}]
  %s2 = inlined_call_operand.vmem [shape: f32[1,32], index: 2, kind: input, shape index: {}]
  %s3 = inlined_call_operand.vmem [shape: f32[1,32], index: 3, kind: input, shape index: {}]
  %s4 = inlined_call_operand.vmem [shape: f32[1,32], index: 4, kind: input, shape index: {}]
  %s5 = inlined_call_operand.vmem [shape: f32[1,32], index: 5, kind: input, shape index: {}]
  %s6 = inlined_call_operand.hbm [shape: bf16[32,32], index: 6, kind: input, shape index: {}]
  %s7 = inlined_call_operand.vmem [shape: f32[1,32], index: 7, kind: input, shape index: {}]
  %s8 = inlined_call_operand.hbm [shape: bf16[32,32], index: 8, kind: input, shape index: {}]
  %s9 = inlined_call_operand.vmem [shape: f32[1,32], index: 9, kind: input, shape index: {}]
  %s10 = inlined_call_operand.hbm [shape: f32[2,8,32], index: 10, kind: output, shape index: {}]
  %s11 = sld [smem:[#allocation0]]
  $region89: #{tpu_custom_call.1} parent=0
    _
  %s13 = ssub.s32 1, %s11
  %s14 = scalar_select 0, %s13, %s11
  $region1: #{tpu_custom_call.1} parent=0
    #allocation2 [shape = 'u8[8192]{0}', space=vmem, size = 0x2000, scoped, tag = 'input window, operand 0']
    #allocation3 [shape = 's32[2]{0}', space=sflag, size = 0x8, scoped, tag = 'scoped memory for tpu_custom_call.1']
    #allocation4 [shape = 's32[2]{0}', space=sflag, size = 0x8, scoped, tag = 'scoped memory for tpu_custom_call.1']
    #allocation5 [shape = 'u8[8192]{0}', space=vmem, size = 0x2000, scoped, tag = 'input window, operand 1, single buffered']
    #allocation6 [shape = 's32[1]{0}', space=sflag, size = 0x4, scoped, tag = 'scoped memory for tpu_custom_call.1']
    #allocation7 [shape = 'u8[8192]{0}', space=vmem, size = 0x2000, scoped, tag = 'input window, operand 6, single buffered']
    #allocation8 [shape = 'u8[8192]{0}', space=vmem, size = 0x2000, scoped, tag = 'input window, operand 8, single buffered']
    #allocation9 [shape = 's32[1]{0}', space=sflag, size = 0x4, scoped, tag = 'scoped memory for tpu_custom_call.1']
    #allocation10 [shape = 'u8[8192]{0}', space=vmem, size = 0x2000, scoped, tag = 'output window, operand 0']
    %15 = vsyncpa [#allocation3], 0
    %s16 = scalar_lea.sflag [#allocation3], 1
    %17 = vsyncpa %s16, 0
    %18 = vsyncpa [#allocation6], 0
    %19 = vsyncpa [#allocation9], 0
    %20 = vsyncpa [#allocation4], 0
    %s21 = scalar_lea.sflag [#allocation4], 1
    %22 = vsyncpa %s21, 0
    loop: start=0, step=1, limit=4
    $region2: #{tpu_custom_call.1} parent=1 // loop_pre_header
      _
    $region3: #{tpu_custom_call.1} parent=1 // loop_header
      %s24 = sphi 0, %s28
      %p25 = scmp.ge.s32.totalorder %s24, 4
      %s34 = sphi 0, %s36
      %s37 = sphi 0, %s34
      %s38 = sphi 0, %s37
      %s54 = sphi 0, %s38
      %s58 = sphi 0, %s58
      %s60 = sphi 0, %s58
      %s61 = sphi 0, %s60
      %s75 = sphi 0, %s61
      %s79 = sphi 0, %s79
      %s81 = sphi 0, %s79
      %s82 = sphi 0, %s81
      %s96 = sphi 0, %s82
      %s100 = sphi 0, %s100
      %s102 = sphi 0, %s100
      %s103 = sphi 0, %s102
      %s117 = sphi 0, %s103
      %s121 = sphi 0, %s121
      %s123 = sphi 0, %s121
      %s124 = sphi 0, %s123
      %s138 = sphi 0, %s124
      %s142 = sphi 0, %s142
      %s144 = sphi 0, %s142
      %s145 = sphi 0, %s144
      %s159 = sphi 0, %s145
      %s163 = sphi 0, %s163
      %s165 = sphi 0, %s163
      %s166 = sphi 0, %s165
      %s180 = sphi 0, %s166
      %s184 = sphi 0, %s184
      %s186 = sphi 0, %s184
      %s187 = sphi 0, %s186
      %s201 = sphi 0, %s187
      %s205 = sphi 0, %s205
      %s207 = sphi 0, %s205
      %s208 = sphi 0, %s207
      %s222 = sphi 0, %s208
      %s226 = sphi 0, %s226
      %s228 = sphi 0, %s226
      %s229 = sphi 0, %s228
      %s243 = sphi 0, %s229
      %s249 = sphi 0, %s251
      %s252 = sphi 0, %s249
      %s253 = sphi 0, %s252
      %s269 = sphi 0, %s253
    $region4: #{tpu_custom_call.1} parent=1 // loop_header_branch
      %27 = sbr.rel (%p25) target = $region8
    $region5: #{tpu_custom_call.1} parent=1 // loop_body
      %s29 = ssub.s32 %s24, 1
      %s30 = ssub.s32 %s24, 2
      %s31 = sadd.s32 %s24, 1
      %s32 = ssub.s32 %s24, %s31
      %p33 = scmp.eq.s32.totalorder %s32, 0
      %s35 = sadd.s32 %s34, 1
      %s36 = scalar_select %p33, %s34, %s35
      %p39 = pneg %p33
      %p40 = scmp.eq.s32.totalorder %s24, 1
      %p41 = por %p39, %p40
      %p42 = scmp.ne.s32.totalorder %s34, %s37
      %p43 = scmp.eq.s32.totalorder %s24, 0
      %p44 = por %p42, %p43
      %p45 = scmp.ne.s32.totalorder %s34, %s37
      %p46 = scmp.eq.s32.totalorder %s29, 1
      %p47 = por %p45, %p46
      %p48 = scmp.ne.s32.totalorder %s37, %s38
      %p49 = scmp.eq.s32.totalorder %s29, 0
      %p50 = por %p48, %p49
      %p51 = scmp.ne.s32.totalorder %s37, %s38
      %p52 = scmp.eq.s32.totalorder %s30, 1
      %p53 = por %p51, %p52
      %p55 = scmp.ne.s32.totalorder %s38, %s54
      %p56 = scmp.eq.s32.totalorder %s30, 0
      %p57 = por %p55, %p56
      %s59 = sadd.s32 %s58, 1
      %p62 = scmp.eq.s32.totalorder %s24, 1
      %p63 = scmp.ne.s32.totalorder %s58, %s60
      %p64 = scmp.eq.s32.totalorder %s24, 0
      %p65 = por %p63, %p64
      %p66 = scmp.ne.s32.totalorder %s58, %s60
      %p67 = scmp.eq.s32.totalorder %s29, 1
      %p68 = por %p66, %p67
      %p69 = scmp.ne.s32.totalorder %s60, %s61
      %p70 = scmp.eq.s32.totalorder %s29, 0
      %p71 = por %p69, %p70
      %p72 = scmp.ne.s32.totalorder %s60, %s61
      %p73 = scmp.eq.s32.totalorder %s30, 1
      %p74 = por %p72, %p73
      %p76 = scmp.ne.s32.totalorder %s61, %s75
      %p77 = scmp.eq.s32.totalorder %s30, 0
      %p78 = por %p76, %p77
      %s80 = sadd.s32 %s79, 1
      %p83 = scmp.eq.s32.totalorder %s24, 1
      %p84 = scmp.ne.s32.totalorder %s79, %s81
      %p85 = scmp.eq.s32.totalorder %s24, 0
      %p86 = por %p84, %p85
      %p87 = scmp.ne.s32.totalorder %s79, %s81
      %p88 = scmp.eq.s32.totalorder %s29, 1
      %p89 = por %p87, %p88
      %p90 = scmp.ne.s32.totalorder %s81, %s82
      %p91 = scmp.eq.s32.totalorder %s29, 0
      %p92 = por %p90, %p91
      %p93 = scmp.ne.s32.totalorder %s81, %s82
      %p94 = scmp.eq.s32.totalorder %s30, 1
      %p95 = por %p93, %p94
      %p97 = scmp.ne.s32.totalorder %s82, %s96
      %p98 = scmp.eq.s32.totalorder %s30, 0
      %p99 = por %p97, %p98
      %s101 = sadd.s32 %s100, 1
      %p104 = scmp.eq.s32.totalorder %s24, 1
      %p105 = scmp.ne.s32.totalorder %s100, %s102
      %p106 = scmp.eq.s32.totalorder %s24, 0
      %p107 = por %p105, %p106
      %p108 = scmp.ne.s32.totalorder %s100, %s102
      %p109 = scmp.eq.s32.totalorder %s29, 1
      %p110 = por %p108, %p109
      %p111 = scmp.ne.s32.totalorder %s102, %s103
      %p112 = scmp.eq.s32.totalorder %s29, 0
      %p113 = por %p111, %p112
      %p114 = scmp.ne.s32.totalorder %s102, %s103
      %p115 = scmp.eq.s32.totalorder %s30, 1
      %p116 = por %p114, %p115
      %p118 = scmp.ne.s32.totalorder %s103, %s117
      %p119 = scmp.eq.s32.totalorder %s30, 0
      %p120 = por %p118, %p119
      %s122 = sadd.s32 %s121, 1
      %p125 = scmp.eq.s32.totalorder %s24, 1
      %p126 = scmp.ne.s32.totalorder %s121, %s123
      %p127 = scmp.eq.s32.totalorder %s24, 0
      %p128 = por %p126, %p127
      %p129 = scmp.ne.s32.totalorder %s121, %s123
      %p130 = scmp.eq.s32.totalorder %s29, 1
      %p131 = por %p129, %p130
      %p132 = scmp.ne.s32.totalorder %s123, %s124
      %p133 = scmp.eq.s32.totalorder %s29, 0
      %p134 = por %p132, %p133
      %p135 = scmp.ne.s32.totalorder %s123, %s124
      %p136 = scmp.eq.s32.totalorder %s30, 1
      %p137 = por %p135, %p136
      %p139 = scmp.ne.s32.totalorder %s124, %s138
      %p140 = scmp.eq.s32.totalorder %s30, 0
      %p141 = por %p139, %p140
      %s143 = sadd.s32 %s142, 1
      %p146 = scmp.eq.s32.totalorder %s24, 1
      %p147 = scmp.ne.s32.totalorder %s142, %s144
      %p148 = scmp.eq.s32.totalorder %s24, 0
      %p149 = por %p147, %p148
      %p150 = scmp.ne.s32.totalorder %s142, %s144
      %p151 = scmp.eq.s32.totalorder %s29, 1
      %p152 = por %p150, %p151
      %p153 = scmp.ne.s32.totalorder %s144, %s145
      %p154 = scmp.eq.s32.totalorder %s29, 0
      %p155 = por %p153, %p154
      %p156 = scmp.ne.s32.totalorder %s144, %s145
      %p157 = scmp.eq.s32.totalorder %s30, 1
      %p158 = por %p156, %p157
      %p160 = scmp.ne.s32.totalorder %s145, %s159
      %p161 = scmp.eq.s32.totalorder %s30, 0
      %p162 = por %p160, %p161
      %s164 = sadd.s32 %s163, 1
      %p167 = scmp.eq.s32.totalorder %s24, 1
      %p168 = scmp.ne.s32.totalorder %s163, %s165
      %p169 = scmp.eq.s32.totalorder %s24, 0
      %p170 = por %p168, %p169
      %p171 = scmp.ne.s32.totalorder %s163, %s165
      %p172 = scmp.eq.s32.totalorder %s29, 1
      %p173 = por %p171, %p172
      %p174 = scmp.ne.s32.totalorder %s165, %s166
      %p175 = scmp.eq.s32.totalorder %s29, 0
      %p176 = por %p174, %p175
      %p177 = scmp.ne.s32.totalorder %s165, %s166
      %p178 = scmp.eq.s32.totalorder %s30, 1
      %p179 = por %p177, %p178
      %p181 = scmp.ne.s32.totalorder %s166, %s180
      %p182 = scmp.eq.s32.totalorder %s30, 0
      %p183 = por %p181, %p182
      %s185 = sadd.s32 %s184, 1
      %p188 = scmp.eq.s32.totalorder %s24, 1
      %p189 = scmp.ne.s32.totalorder %s184, %s186
      %p190 = scmp.eq.s32.totalorder %s24, 0
      %p191 = por %p189, %p190
      %p192 = scmp.ne.s32.totalorder %s184, %s186
      %p193 = scmp.eq.s32.totalorder %s29, 1
      %p194 = por %p192, %p193
      %p195 = scmp.ne.s32.totalorder %s186, %s187
      %p196 = scmp.eq.s32.totalorder %s29, 0
      %p197 = por %p195, %p196
      %p198 = scmp.ne.s32.totalorder %s186, %s187
      %p199 = scmp.eq.s32.totalorder %s30, 1
      %p200 = por %p198, %p199
      %p202 = scmp.ne.s32.totalorder %s187, %s201
      %p203 = scmp.eq.s32.totalorder %s30, 0
      %p204 = por %p202, %p203
      %s206 = sadd.s32 %s205, 1
      %p209 = scmp.eq.s32.totalorder %s24, 1
      %p210 = scmp.ne.s32.totalorder %s205, %s207
      %p211 = scmp.eq.s32.totalorder %s24, 0
      %p212 = por %p210, %p211
      %p213 = scmp.ne.s32.totalorder %s205, %s207
      %p214 = scmp.eq.s32.totalorder %s29, 1
      %p215 = por %p213, %p214
      %p216 = scmp.ne.s32.totalorder %s207, %s208
      %p217 = scmp.eq.s32.totalorder %s29, 0
      %p218 = por %p216, %p217
      %p219 = scmp.ne.s32.totalorder %s207, %s208
      %p220 = scmp.eq.s32.totalorder %s30, 1
      %p221 = por %p219, %p220
      %p223 = scmp.ne.s32.totalorder %s208, %s222
      %p224 = scmp.eq.s32.totalorder %s30, 0
      %p225 = por %p223, %p224
      %s227 = sadd.s32 %s226, 1
      %p230 = scmp.eq.s32.totalorder %s24, 1
      %p231 = scmp.ne.s32.totalorder %s226, %s228
      %p232 = scmp.eq.s32.totalorder %s24, 0
      %p233 = por %p231, %p232
      %p234 = scmp.ne.s32.totalorder %s226, %s228
      %p235 = scmp.eq.s32.totalorder %s29, 1
      %p236 = por %p234, %p235
      %p237 = scmp.ne.s32.totalorder %s228, %s229
      %p238 = scmp.eq.s32.totalorder %s29, 0
      %p239 = por %p237, %p238
      %p240 = scmp.ne.s32.totalorder %s228, %s229
      %p241 = scmp.eq.s32.totalorder %s30, 1
      %p242 = por %p240, %p241
      %p244 = scmp.ne.s32.totalorder %s229, %s243
      %p245 = scmp.eq.s32.totalorder %s30, 0
      %p246 = por %p244, %p245
      %s247 = ssub.s32 %s24, %s31
      %p248 = scmp.eq.s32.totalorder %s247, 0
      %s250 = sadd.s32 %s249, 1
      %s251 = scalar_select %p248, %s249, %s250
      %p254 = pneg %p248
      %p255 = scmp.eq.s32.totalorder %s24, 1
      %p256 = por %p254, %p255
      %p257 = scmp.ne.s32.totalorder %s249, %s252
      %p258 = scmp.eq.s32.totalorder %s24, 0
      %p259 = por %p257, %p258
      %p260 = scmp.ne.s32.totalorder %s249, %s252
      %p261 = scmp.eq.s32.totalorder %s29, 1
      %p262 = por %p260, %p261
      %p263 = scmp.ne.s32.totalorder %s252, %s253
      %p264 = scmp.eq.s32.totalorder %s29, 0
      %p265 = por %p263, %p264
      %p266 = scmp.ne.s32.totalorder %s252, %s253
      %p267 = scmp.eq.s32.totalorder %s30, 1
      %p268 = por %p266, %p267
      %p270 = scmp.ne.s32.totalorder %s253, %s269
      %p271 = scmp.eq.s32.totalorder %s30, 0
      %p272 = por %p270, %p271
      %p273 = scmp.le.s32.totalorder 1, %s24
      %p274 = scmp.lt.s32.totalorder %s24, 3
      %p275 = pnand %p273, %p274
      %p276 = pneg %p275
      // Predicated region
      $region9: #{tpu_custom_call.1} parent=5 // pred_check
        _
      $region10: #{tpu_custom_call.1} parent=5 // pred_check_branch
        %278 = sbr.rel (%p275) target = $region12
      $region11: #{tpu_custom_call.1} parent=5 // pred_region
        %s279 = ssub.s32 %s24, 1
        // Predicated region
        $region13: #{tpu_custom_call.1} parent=11 // pred_check
          %p280 = pneg %p71
        $region14: #{tpu_custom_call.1} parent=11 // pred_check_branch
          %282 = sbr.rel (%p280) target = $region16
        $region15: #{tpu_custom_call.1} parent=11 // pred_region
          %284 = vsyncadd [#allocation6], 0
          %s285 = sshll.u32 %s1, 4
          %s286 = int_to_ptr.hbm [resolvable:$true] %s285
          %s287 = sshll.u32 [#allocation5], 4
          %s288 = int_to_ptr.vmem [resolvable:$true] %s287
          %293 = dma.hbm_to_vmem [thread:$0]  %s286, 256, %s288, [#allocation6], 64, 64, 4
        $region16: #{tpu_custom_call.1} parent=11 // pred_fallthru
          _
        // Predicated region
        $region17: #{tpu_custom_call.1} parent=11 // pred_check
          %p294 = pneg %p92
        $region18: #{tpu_custom_call.1} parent=11 // pred_check_branch
          %296 = sbr.rel (%p294) target = $region20
        $region19: #{tpu_custom_call.1} parent=11 // pred_region
          _
        $region20: #{tpu_custom_call.1} parent=11 // pred_fallthru
          _
        // Predicated region
        $region21: #{tpu_custom_call.1} parent=11 // pred_check
          %p297 = pneg %p113
        $region22: #{tpu_custom_call.1} parent=11 // pred_check_branch
          %299 = sbr.rel (%p297) target = $region24
        $region23: #{tpu_custom_call.1} parent=11 // pred_region
          _
        $region24: #{tpu_custom_call.1} parent=11 // pred_fallthru
          _
        // Predicated region
        $region25: #{tpu_custom_call.1} parent=11 // pred_check
          %p300 = pneg %p134
        $region26: #{tpu_custom_call.1} parent=11 // pred_check_branch
          %302 = sbr.rel (%p300) target = $region28
        $region27: #{tpu_custom_call.1} parent=11 // pred_region
          _
        $region28: #{tpu_custom_call.1} parent=11 // pred_fallthru
          _
        // Predicated region
        $region29: #{tpu_custom_call.1} parent=11 // pred_check
          %p303 = pneg %p155
        $region30: #{tpu_custom_call.1} parent=11 // pred_check_branch
          %305 = sbr.rel (%p303) target = $region32
        $region31: #{tpu_custom_call.1} parent=11 // pred_region
          _
        $region32: #{tpu_custom_call.1} parent=11 // pred_fallthru
          _
        // Predicated region
        $region33: #{tpu_custom_call.1} parent=11 // pred_check
          %p306 = pneg %p176
        $region34: #{tpu_custom_call.1} parent=11 // pred_check_branch
          %308 = sbr.rel (%p306) target = $region36
        $region35: #{tpu_custom_call.1} parent=11 // pred_region
          %310 = vsyncadd [#allocation6], 0
          %s311 = sshll.u32 %s6, 4
          %s312 = int_to_ptr.hbm [resolvable:$true] %s311
          %s313 = sshll.u32 [#allocation7], 4
          %s314 = int_to_ptr.vmem [resolvable:$true] %s313
          %319 = dma.hbm_to_vmem [thread:$0]  %s312, 256, %s314, [#allocation6], 64, 64, 4
        $region36: #{tpu_custom_call.1} parent=11 // pred_fallthru
          _
        // Predicated region
        $region37: #{tpu_custom_call.1} parent=11 // pred_check
          %p320 = pneg %p197
        $region38: #{tpu_custom_call.1} parent=11 // pred_check_branch
          %322 = sbr.rel (%p320) target = $region40
        $region39: #{tpu_custom_call.1} parent=11 // pred_region
          _
        $region40: #{tpu_custom_call.1} parent=11 // pred_fallthru
          _
        // Predicated region
        $region41: #{tpu_custom_call.1} parent=11 // pred_check
          %p323 = pneg %p218
        $region42: #{tpu_custom_call.1} parent=11 // pred_check_branch
          %325 = sbr.rel (%p323) target = $region44
        $region43: #{tpu_custom_call.1} parent=11 // pred_region
          %327 = vsyncadd [#allocation9], 0
          %s328 = sshll.u32 %s8, 4
          %s329 = int_to_ptr.hbm [resolvable:$true] %s328
          %s330 = sshll.u32 [#allocation8], 4
          %s331 = int_to_ptr.vmem [resolvable:$true] %s330
          %336 = dma.hbm_to_vmem [thread:$0]  %s329, 256, %s331, [#allocation9], 64, 64, 4
        $region44: #{tpu_custom_call.1} parent=11 // pred_fallthru
          _
        // Predicated region
        $region45: #{tpu_custom_call.1} parent=11 // pred_check
          %p337 = pneg %p239
        $region46: #{tpu_custom_call.1} parent=11 // pred_check_branch
          %339 = sbr.rel (%p337) target = $region48
        $region47: #{tpu_custom_call.1} parent=11 // pred_region
          _
        $region48: #{tpu_custom_call.1} parent=11 // pred_fallthru
          _
      $region12: #{tpu_custom_call.1} parent=5 // pred_fallthru
        _
      %p340 = scmp.lt.s32.totalorder %s24, 2
      // Predicated region
      $region49: #{tpu_custom_call.1} parent=5 // pred_check
        %p341 = pneg %p340
      $region50: #{tpu_custom_call.1} parent=5 // pred_check_branch
        %343 = sbr.rel (%p341) target = $region52
      $region51: #{tpu_custom_call.1} parent=5 // pred_region
        // Predicated region
        $region53: #{tpu_custom_call.1} parent=51 // pred_check
          %p344 = pneg %p44
        $region54: #{tpu_custom_call.1} parent=51 // pred_check_branch
          %346 = sbr.rel (%p344) target = $region56
        $region55: #{tpu_custom_call.1} parent=51 // pred_region
          %s347 = sand.u32 %s34, 1
          %s348 = scalar_lea.sflag [#allocation3], %s347
          %s349 = sand.u32 %s34, 1
          %s350 = smul.addr %s349, 8
          %s351 = scalar_lea.vmem [#allocation2], %s350
          %353 = vsyncadd %s348, 0
          %s354 = smul.addr %s24, 8
          %s355 = scalar_lea.hbm %s0, %s354
          %s357 = sshll.u32 %s355, 4
          %s358 = int_to_ptr.hbm [resolvable:$true] %s357
          %s359 = sshll.u32 %s351, 4
          %s360 = int_to_ptr.vmem [resolvable:$true] %s359
          %362 = dma.hbm_to_vmem [thread:$0]  %s358, 128, %s360, %s348
        $region56: #{tpu_custom_call.1} parent=51 // pred_fallthru
          _
      $region52: #{tpu_custom_call.1} parent=5 // pred_fallthru
        _
      %p363 = scmp.le.s32.totalorder 1, %s24
      %p364 = scmp.lt.s32.totalorder %s24, 3
      %p365 = pnand %p363, %p364
      %p366 = pneg %p365
      // Predicated region
      $region57: #{tpu_custom_call.1} parent=5 // pred_check
        _
      $region58: #{tpu_custom_call.1} parent=5 // pred_check_branch
        %368 = sbr.rel (%p365) target = $region60
      $region59: #{tpu_custom_call.1} parent=5 // pred_region
        %s369 = ssub.s32 %s24, 1
        %s370 = sand.u32 %s37, 1
        %s371 = scalar_lea.sflag [#allocation3], %s370
        %s372 = sand.u32 %s37, 1
        %s373 = smul.addr %s372, 8
        %s374 = scalar_lea.vmem [#allocation2], %s373
        // Predicated region
        $region61: #{tpu_custom_call.1} parent=59 // pred_check
          %p375 = pneg %p50
        $region62: #{tpu_custom_call.1} parent=59 // pred_check_branch
          %377 = sbr.rel (%p375) target = $region64
        $region63: #{tpu_custom_call.1} parent=59 // pred_region
          %379 = dma.done %s371, 128
        $region64: #{tpu_custom_call.1} parent=59 // pred_fallthru
          _
        // Predicated region
        $region65: #{tpu_custom_call.1} parent=59 // pred_check
          %p380 = pneg %p71
        $region66: #{tpu_custom_call.1} parent=59 // pred_check_branch
          %382 = sbr.rel (%p380) target = $region68
        $region67: #{tpu_custom_call.1} parent=59 // pred_region
          %384 = dma.done [#allocation6], 256
        $region68: #{tpu_custom_call.1} parent=59 // pred_fallthru
          _
        // Predicated region
        $region69: #{tpu_custom_call.1} parent=59 // pred_check
          %p385 = pneg %p176
        $region70: #{tpu_custom_call.1} parent=59 // pred_check_branch
          %387 = sbr.rel (%p385) target = $region72
        $region71: #{tpu_custom_call.1} parent=59 // pred_region
          %389 = dma.done [#allocation6], 256
        $region72: #{tpu_custom_call.1} parent=59 // pred_fallthru
          _
        // Predicated region
        $region73: #{tpu_custom_call.1} parent=59 // pred_check
          %p390 = pneg %p218
        $region74: #{tpu_custom_call.1} parent=59 // pred_check_branch
          %392 = sbr.rel (%p390) target = $region76
        $region75: #{tpu_custom_call.1} parent=59 // pred_region
          %394 = dma.done [#allocation9], 256
        $region76: #{tpu_custom_call.1} parent=59 // pred_fallthru
          _
        %s395 = sand.u32 %s37, 1
        %s396 = scalar_lea.sflag [#allocation3], %s395
        %s397 = sand.u32 %s37, 1
        %s398 = smul.addr %s397, 8
        %s399 = scalar_lea.vmem [#allocation2], %s398
        %p400 = pneg %p50
        %p401 = pneg %p47
        %p402 = pneg %p71
        %p403 = pneg %p68
        %p404 = pneg %p92
        %p405 = pneg %p89
        %p406 = pneg %p113
        %p407 = pneg %p110
        %p408 = pneg %p134
        %p409 = pneg %p131
        %p410 = pneg %p155
        %p411 = pneg %p152
        %p412 = pneg %p176
        %p413 = pneg %p173
        %p414 = pneg %p197
        %p415 = pneg %p194
        %p416 = pneg %p218
        %p417 = pneg %p215
        %p418 = pneg %p239
        %p419 = pneg %p236
        %p420 = pneg %p265
        %p421 = pneg %p262
        %s422 = sand.u32 %s252, 1
        %s423 = scalar_lea.sflag [#allocation4], %s422
        %s424 = sand.u32 %s252, 1
        %s425 = smul.addr %s424, 8
        %s426 = scalar_lea.vmem [#allocation10], %s425
        %v428 = vld [vmem:[%s374] sm:$0xff]
        %v429 = vld [vmem:[%s2] sm:$0x1]
        %v430 = vld [vmem:[%s3] sm:$0x1]
        %vm431 = vcmask 261120
        %v432 = vsel %vm431, %v428, 0.0
        %433 = vadd.xlane.f32.xlu0 %v432
        %v434 = vpop.xlane.xlu0 %433
        %v435 = vrcp.pop 32.0
        %v436 = vmul.f32 32.0, %v435
        %v437 = vsub.f32 1.0, %v436
        %v438 = vmul.f32 %v435, %v437
        %v439 = vadd.f32 %v435, %v438
        %vm440 = vweird.f32 %v435
        %v441 = vsel %vm440, %v435, %v439
        %v442 = vmul.f32 %v434, %v441
        %v443 = vmul.f32 %v428, %v428
        %v444 = vsel %vm431, %v443, 0.0
        %445 = vadd.xlane.f32.xlu0 %v444
        %v446 = vpop.xlane.xlu0 %445
        %v447 = vmul.f32 %v446, %v441
        %v448 = vmul.f32 %v442, %v442
        %v449 = vsub.f32 %v447, %v448
        %v450 = vmax.f32 %v449, 0.0
        %v451 = vsub.f32 %v428, %v442
        %v452 = vadd.f32 %v450, 1e-05
        %v453 = vrsqrt.pop %v452
        %v454 = vmul.f32 %v453, %v452
        %v455 = vmul.f32 %v454, %v453
        %v456 = vmul.f32 0.5, %v455
        %v457 = vsub.f32 1.5, %v456
        %v458 = vmul.f32 %v453, %v457
        %vm459 = vweird.f32 %v452
        %vm460 = vweird.f32 %v453
        %vm461 = vmor %vm459, %vm460
        %v462 = vsel %vm461, %v453, %v458
        %v463 = vmul.f32 %v451, %v462
        %v465 = vperm.slane %v429, 0
        %v467 = vmul.f32 %v463, %v465
        %v469 = vperm.slane %v430, 0
        %v471 = vadd.f32 %v467, %v469
        %v472 = vpack.c.bf16 %v471, %v471
        %v473 = vld [vmem:[#allocation5] sm:$0xf]
        %v474 = vld [vmem:[#allocation5 + $0x4] sm:$0xf]
        %v475 = vld [vmem:[#allocation5 + $0x8] sm:$0xf]
        %v476 = vld [vmem:[#allocation5 + $0xc] sm:$0xf]
        %v481 = vunpack.c.l.b16 %v473
        %v482 = vunpack.c.l.b16 %v474
        %v483 = vunpack.c.l.b16 %v475
        %v484 = vunpack.c.l.b16 %v476
        %v485 = vpack.c.b16 %v482, %v481
        %v486 = vpack.c.b16 %v484, %v483
        %v490 = vsel %vm431, %v472, 0
        %492 = vmatpush.bf16.msra.mxu0 0
        %493 = vmatpush.bf16.msra.mxu0 0
        %494 = vmatpush.bf16.msra.mxu0 0
        %495 = vmatpush.bf16.msra.mxu0 0
        %496 = vmatpush.bf16.msra.mxu0 0
        %497 = vmatpush.bf16.msra.mxu0 0
        %498 = vmatpush.bf16.msra.mxu0 %v486
        %499 = vmatpush.bf16.msra.mxu0 %v485
        %500 = vmatmul.bf16.gmra.mxu0 %v490
        %v501 = vpop.f32.mrf.mxu0
        %v502 = vadd.f32 0.0, %v501
        %v503 = vpop.f32.mrf.mxu0
        %504 = vdwg.mxu0
        %v505 = vpack.c.bf16 %v502, %v502
        %v507 = vunpack.c.l.b16 %v505
        %v508 = vpack.c.b16 %v507, %v507
        %509 = vrot.lane.b32.xlu0 %v508, 96
        %v510 = vpop.permute.xlu0 %509
        %vm511 = vcmask 64512
        %v513 = vsel %vm511, %v505, 0
        %v516 = vsel %vm511, %v510, 0
        %518 = vmatpush.bf16.xpose.msra.mxu0 0
        %519 = vmatpush.bf16.xpose.msra.mxu0 0
        %520 = vmatpush.bf16.xpose.msra.mxu0 0
        %521 = vmatpush.bf16.xpose.msra.mxu0 0
        %522 = vmatpush.bf16.xpose.msra.mxu0 0
        %523 = vmatpush.bf16.xpose.msra.mxu0 0
        %524 = vmatpush.bf16.xpose.msra.mxu0 0
        %525 = vmatpush.bf16.xpose.msra.mxu0 %v516
        %526 = vmatmul.bf16.gmra.mxu0 %v513
        %v527 = vpop.f32.mrf.mxu0
        %v528 = vadd.f32 0.0, %v527
        %v529 = vpop.f32.mrf.mxu0
        %530 = vdwg.mxu0
        %v531 = vsel %vm511, %v528, -inf
        %532 = vmax.xlane.f32.xlu0 %v531
        %v533 = vpop.xlane.xlu0 %532
        %v534 = vsub.f32 %v528, %v533
        %v535 = vmul.f32 %v534, 1.442695
        %v536 = vpow.pop %v535
        %v537 = vsel %vm511, %v536, 0.0
        %538 = vadd.xlane.f32.xlu0 %v537
        %v539 = vpop.xlane.xlu0 %538
        %v540 = vrcp.pop %v539
        %v541 = vmul.f32 %v536, %v540
        %v542 = vpack.c.bf16 %v541, %v541
        %543 = vrot.lane.b32.xlu0 %v508, 64
        %v544 = vpop.permute.xlu0 %543
        %v546 = vsel %vm511, %v542, 0
        %vm548 = vcmask 1043456
        %v550 = vsel %vm548, %v544, 0
        %552 = vmatpush.bf16.msra.mxu0 0
        %553 = vmatpush.bf16.msra.mxu0 0
        %554 = vmatpush.bf16.msra.mxu0 0
        %555 = vmatpush.bf16.msra.mxu0 0
        %556 = vmatpush.bf16.msra.mxu0 0
        %557 = vmatpush.bf16.msra.mxu0 0
        %558 = vmatpush.bf16.msra.mxu0 0
        %559 = vmatpush.bf16.msra.mxu0 %v550
        %560 = vmatmul.bf16.gmra.mxu0 %v546
        %v561 = vpop.f32.mrf.mxu0
        %v562 = vadd.f32 0.0, %v561
        %v563 = vpop.f32.mrf.mxu0
        %564 = vdwg.mxu0
        %565 = vrot.lane.b32.xlu0 %v508, 120
        %v566 = vpop.permute.xlu0 %565
        %567 = vrot.lane.b32.xlu0 %v508, 88
        %v568 = vpop.permute.xlu0 %567
        %v570 = vsel %vm511, %v566, 0
        %v573 = vsel %vm511, %v568, 0
        %575 = vmatpush.bf16.xpose.msra.mxu0 0
        %576 = vmatpush.bf16.xpose.msra.mxu0 0
        %577 = vmatpush.bf16.xpose.msra.mxu0 0
        %578 = vmatpush.bf16.xpose.msra.mxu0 0
        %579 = vmatpush.bf16.xpose.msra.mxu0 0
        %580 = vmatpush.bf16.xpose.msra.mxu0 0
        %581 = vmatpush.bf16.xpose.msra.mxu0 0
        %582 = vmatpush.bf16.xpose.msra.mxu0 %v573
        %583 = vmatmul.bf16.gmra.mxu0 %v570
        %v584 = vpop.f32.mrf.mxu0
        %v585 = vadd.f32 0.0, %v584
        %v586 = vpop.f32.mrf.mxu0
        %587 = vdwg.mxu0
        %v588 = vsel %vm511, %v585, -inf
        %589 = vmax.xlane.f32.xlu0 %v588
        %v590 = vpop.xlane.xlu0 %589
        %v591 = vsub.f32 %v585, %v590
        %v592 = vmul.f32 %v591, 1.442695
        %v593 = vpow.pop %v592
        %v594 = vsel %vm511, %v593, 0.0
        %595 = vadd.xlane.f32.xlu0 %v594
        %v596 = vpop.xlane.xlu0 %595
        %v597 = vrcp.pop %v596
        %v598 = vmul.f32 %v593, %v597
        %v599 = vpack.c.bf16 %v598, %v598
        %600 = vrot.lane.b32.xlu0 %v508, 56
        %v601 = vpop.permute.xlu0 %600
        %v603 = vsel %vm511, %v599, 0
        %v606 = vsel %vm548, %v601, 0
        %608 = vmatpush.bf16.msra.mxu0 0
        %609 = vmatpush.bf16.msra.mxu0 0
        %610 = vmatpush.bf16.msra.mxu0 0
        %611 = vmatpush.bf16.msra.mxu0 0
        %612 = vmatpush.bf16.msra.mxu0 0
        %613 = vmatpush.bf16.msra.mxu0 0
        %614 = vmatpush.bf16.msra.mxu0 0
        %615 = vmatpush.bf16.msra.mxu0 %v606
        %616 = vmatmul.bf16.gmra.mxu0 %v603
        %v617 = vpop.f32.mrf.mxu0
        %v618 = vadd.f32 0.0, %v617
        %v619 = vpop.f32.mrf.mxu0
        %620 = vdwg.mxu0
        %621 = vrot.lane.b32.xlu0 %v508, 112
        %v622 = vpop.permute.xlu0 %621
        %623 = vrot.lane.b32.xlu0 %v508, 80
        %v624 = vpop.permute.xlu0 %623
        %v626 = vsel %vm511, %v622, 0
        %v629 = vsel %vm511, %v624, 0
        %631 = vmatpush.bf16.xpose.msra.mxu0 0
        %632 = vmatpush.bf16.xpose.msra.mxu0 0
        %633 = vmatpush.bf16.xpose.msra.mxu0 0
        %634 = vmatpush.bf16.xpose.msra.mxu0 0
        %635 = vmatpush.bf16.xpose.msra.mxu0 0
        %636 = vmatpush.bf16.xpose.msra.mxu0 0
        %637 = vmatpush.bf16.xpose.msra.mxu0 0
        %638 = vmatpush.bf16.xpose.msra.mxu0 %v629
        %639 = vmatmul.bf16.gmra.mxu0 %v626
        %v640 = vpop.f32.mrf.mxu0
        %v641 = vadd.f32 0.0, %v640
        %v642 = vpop.f32.mrf.mxu0
        %643 = vdwg.mxu0
        %v644 = vsel %vm511, %v641, -inf
        %645 = vmax.xlane.f32.xlu0 %v644
        %v646 = vpop.xlane.xlu0 %645
        %v647 = vsub.f32 %v641, %v646
        %v648 = vmul.f32 %v647, 1.442695
        %v649 = vpow.pop %v648
        %v650 = vsel %vm511, %v649, 0.0
        %651 = vadd.xlane.f32.xlu0 %v650
        %v652 = vpop.xlane.xlu0 %651
        %v653 = vrcp.pop %v652
        %v654 = vmul.f32 %v649, %v653
        %v655 = vpack.c.bf16 %v654, %v654
        %656 = vrot.lane.b32.xlu0 %v508, 48
        %v657 = vpop.permute.xlu0 %656
        %v659 = vsel %vm511, %v655, 0
        %v662 = vsel %vm548, %v657, 0
        %664 = vmatpush.bf16.msra.mxu0 0
        %665 = vmatpush.bf16.msra.mxu0 0
        %666 = vmatpush.bf16.msra.mxu0 0
        %667 = vmatpush.bf16.msra.mxu0 0
        %668 = vmatpush.bf16.msra.mxu0 0
        %669 = vmatpush.bf16.msra.mxu0 0
        %670 = vmatpush.bf16.msra.mxu0 0
        %671 = vmatpush.bf16.msra.mxu0 %v662
        %672 = vmatmul.bf16.gmra.mxu0 %v659
        %v673 = vpop.f32.mrf.mxu0
        %v674 = vadd.f32 0.0, %v673
        %v675 = vpop.f32.mrf.mxu0
        %676 = vdwg.mxu0
        %677 = vrot.lane.b32.xlu0 %v508, 104
        %v678 = vpop.permute.xlu0 %677
        %679 = vrot.lane.b32.xlu0 %v508, 72
        %v680 = vpop.permute.xlu0 %679
        %v682 = vsel %vm511, %v678, 0
        %v685 = vsel %vm511, %v680, 0
        %687 = vmatpush.bf16.xpose.msra.mxu0 0
        %688 = vmatpush.bf16.xpose.msra.mxu0 0
        %689 = vmatpush.bf16.xpose.msra.mxu0 0
        %690 = vmatpush.bf16.xpose.msra.mxu0 0
        %691 = vmatpush.bf16.xpose.msra.mxu0 0
        %692 = vmatpush.bf16.xpose.msra.mxu0 0
        %693 = vmatpush.bf16.xpose.msra.mxu0 0
        %694 = vmatpush.bf16.xpose.msra.mxu0 %v685
        %695 = vmatmul.bf16.gmra.mxu0 %v682
        %v696 = vpop.f32.mrf.mxu0
        %v697 = vadd.f32 0.0, %v696
        %v698 = vpop.f32.mrf.mxu0
        %699 = vdwg.mxu0
        %v700 = vsel %vm511, %v697, -inf
        %701 = vmax.xlane.f32.xlu0 %v700
        %v702 = vpop.xlane.xlu0 %701
        %v703 = vsub.f32 %v697, %v702
        %v704 = vmul.f32 %v703, 1.442695
        %v705 = vpow.pop %v704
        %v706 = vsel %vm511, %v705, 0.0
        %707 = vadd.xlane.f32.xlu0 %v706
        %v708 = vpop.xlane.xlu0 %707
        %v709 = vrcp.pop %v708
        %v710 = vmul.f32 %v705, %v709
        %v711 = vpack.c.bf16 %v710, %v710
        %712 = vrot.lane.b32.xlu0 %v508, 40
        %v713 = vpop.permute.xlu0 %712
        %v715 = vsel %vm511, %v711, 0
        %v718 = vsel %vm548, %v713, 0
        %720 = vmatpush.bf16.msra.mxu0 0
        %721 = vmatpush.bf16.msra.mxu0 0
        %722 = vmatpush.bf16.msra.mxu0 0
        %723 = vmatpush.bf16.msra.mxu0 0
        %724 = vmatpush.bf16.msra.mxu0 0
        %725 = vmatpush.bf16.msra.mxu0 0
        %726 = vmatpush.bf16.msra.mxu0 0
        %727 = vmatpush.bf16.msra.mxu0 %v718
        %728 = vmatmul.bf16.gmra.mxu0 %v715
        %v729 = vpop.f32.mrf.mxu0
        %v730 = vadd.f32 0.0, %v729
        %v731 = vpop.f32.mrf.mxu0
        %732 = vdwg.mxu0
        %734 = vrot.lane.b32.xlu0 %v618, 8
        %v735 = vpop.permute.xlu0 %734
        %738 = vrot.lane.b32.xlu0 %v674, 16
        %v739 = vpop.permute.xlu0 %738
        %742 = vrot.lane.b32.xlu0 %v730, 24
        %v743 = vpop.permute.xlu0 %742
        %v745 = vsel %vm511, %v562, %v735
        %vm746 = vcmask 130048
        %v747 = vsel %vm746, %v745, %v739
        %vm748 = vcmask 195584
        %v749 = vsel %vm748, %v747, %v743
        %v750 = vadd.f32 %v471, %v749
        %v751 = vld [vmem:[%s4] sm:$0x1]
        %v752 = vld [vmem:[%s5] sm:$0x1]
        %v753 = vsel %vm431, %v750, 0.0
        %754 = vadd.xlane.f32.xlu0 %v753
        %v755 = vpop.xlane.xlu0 %754
        %v756 = vmul.f32 %v755, %v441
        %v757 = vmul.f32 %v750, %v750
        %v758 = vsel %vm431, %v757, 0.0
        %759 = vadd.xlane.f32.xlu0 %v758
        %v760 = vpop.xlane.xlu0 %759
        %v761 = vmul.f32 %v760, %v441
        %v762 = vmul.f32 %v756, %v756
        %v763 = vsub.f32 %v761, %v762
        %v764 = vmax.f32 %v763, 0.0
        %v765 = vsub.f32 %v750, %v756
        %v766 = vadd.f32 %v764, 1e-05
        %v767 = vrsqrt.pop %v766
        %v768 = vmul.f32 %v767, %v766
        %v769 = vmul.f32 %v768, %v767
        %v770 = vmul.f32 0.5, %v769
        %v771 = vsub.f32 1.5, %v770
        %v772 = vmul.f32 %v767, %v771
        %vm773 = vweird.f32 %v766
        %vm774 = vweird.f32 %v767
        %vm775 = vmor %vm773, %vm774
        %v776 = vsel %vm775, %v767, %v772
        %v777 = vmul.f32 %v765, %v776
        %v779 = vperm.slane %v751, 0
        %v781 = vmul.f32 %v777, %v779
        %v783 = vperm.slane %v752, 0
        %v785 = vadd.f32 %v781, %v783
        %v786 = vpack.c.bf16 %v785, %v785
        %v787 = vld [vmem:[#allocation7] sm:$0xf]
        %v788 = vld [vmem:[#allocation7 + $0x4] sm:$0xf]
        %v789 = vld [vmem:[#allocation7 + $0x8] sm:$0xf]
        %v790 = vld [vmem:[#allocation7 + $0xc] sm:$0xf]
        %v791 = vld [vmem:[%s7] sm:$0x1]
        %v793 = vperm.slane %v791, 0
        %v799 = vunpack.c.l.b16 %v787
        %v800 = vunpack.c.l.b16 %v788
        %v801 = vunpack.c.l.b16 %v789
        %v802 = vunpack.c.l.b16 %v790
        %v803 = vpack.c.b16 %v800, %v799
        %v804 = vpack.c.b16 %v802, %v801
        %v808 = vsel %vm431, %v786, 0
        %810 = vmatpush.bf16.msra.mxu0 0
        %811 = vmatpush.bf16.msra.mxu0 0
        %812 = vmatpush.bf16.msra.mxu0 0
        %813 = vmatpush.bf16.msra.mxu0 0
        %814 = vmatpush.bf16.msra.mxu0 0
        %815 = vmatpush.bf16.msra.mxu0 0
        %816 = vmatpush.bf16.msra.mxu0 %v804
        %817 = vmatpush.bf16.msra.mxu0 %v803
        %818 = vmatmul.bf16.gmra.mxu0 %v808
        %v819 = vpop.f32.mrf.mxu0
        %v820 = vadd.f32 %v793, %v819
        %v821 = vpop.f32.mrf.mxu0
        %822 = vdwg.mxu0
        %v823 = vmax.f32 %v820, 0.0
        %v824 = vpack.c.bf16 %v823, %v823
        %v825 = vld [vmem:[#allocation8] sm:$0xf]
        %v826 = vld [vmem:[#allocation8 + $0x4] sm:$0xf]
        %v827 = vld [vmem:[#allocation8 + $0x8] sm:$0xf]
        %v828 = vld [vmem:[#allocation8 + $0xc] sm:$0xf]
        %v829 = vld [vmem:[%s9] sm:$0x1]
        %v831 = vperm.slane %v829, 0
        %v837 = vunpack.c.l.b16 %v825
        %v838 = vunpack.c.l.b16 %v826
        %v839 = vunpack.c.l.b16 %v827
        %v840 = vunpack.c.l.b16 %v828
        %v841 = vpack.c.b16 %v838, %v837
        %v842 = vpack.c.b16 %v840, %v839
        %v846 = vsel %vm431, %v824, 0
        %848 = vmatpush.bf16.msra.mxu0 0
        %849 = vmatpush.bf16.msra.mxu0 0
        %850 = vmatpush.bf16.msra.mxu0 0
        %851 = vmatpush.bf16.msra.mxu0 0
        %852 = vmatpush.bf16.msra.mxu0 0
        %853 = vmatpush.bf16.msra.mxu0 0
        %854 = vmatpush.bf16.msra.mxu0 %v842
        %855 = vmatpush.bf16.msra.mxu0 %v841
        %856 = vmatmul.bf16.gmra.mxu0 %v846
        %v857 = vpop.f32.mrf.mxu0
        %v858 = vadd.f32 %v831, %v857
        %v859 = vpop.f32.mrf.mxu0
        %860 = vdwg.mxu0
        %v861 = vadd.f32 %v785, %v858
        %862 = vst.msk [vmem:[%s426] sm:$0xff] %vm431, %v861
        %s863 = sand.u32 %s252, 1
        %s864 = scalar_lea.sflag [#allocation4], %s863
        %s865 = sand.u32 %s252, 1
        %s866 = smul.addr %s865, 8
        %s867 = scalar_lea.vmem [#allocation10], %s866
        // Predicated region
        $region77: #{tpu_custom_call.1} parent=59 // pred_check
          %p868 = pneg %p262
        $region78: #{tpu_custom_call.1} parent=59 // pred_check_branch
          %870 = sbr.rel (%p868) target = $region80
        $region79: #{tpu_custom_call.1} parent=59 // pred_region
          %872 = vsyncadd %s864, 0
          %s873 = smul.addr %s29, 8
          %s874 = scalar_lea.hbm %s10, %s873
          %s876 = sshll.u32 %s867, 4
          %s877 = int_to_ptr.vmem [resolvable:$true] %s876
          %s878 = sshll.u32 %s874, 4
          %s879 = int_to_ptr.hbm [resolvable:$true] %s878
          %881 = dma.vmem_to_hbm [thread:$0]  %s877, 128, %s879, %s864
        $region80: #{tpu_custom_call.1} parent=59 // pred_fallthru
          _
      $region60: #{tpu_custom_call.1} parent=5 // pred_fallthru
        _
      %p882 = scmp.le.s32.totalorder 2, %s24
      // Predicated region
      $region81: #{tpu_custom_call.1} parent=5 // pred_check
        %p883 = pneg %p882
      $region82: #{tpu_custom_call.1} parent=5 // pred_check_branch
        %885 = sbr.rel (%p883) target = $region84
      $region83: #{tpu_custom_call.1} parent=5 // pred_region
        %s886 = ssub.s32 %s24, 2
        // Predicated region
        $region85: #{tpu_custom_call.1} parent=83 // pred_check
          %p887 = pneg %p268
        $region86: #{tpu_custom_call.1} parent=83 // pred_check_branch
          %889 = sbr.rel (%p887) target = $region88
        $region87: #{tpu_custom_call.1} parent=83 // pred_region
          %s890 = sand.u32 %s253, 1
          %s891 = scalar_lea.sflag [#allocation4], %s890
          %s892 = sand.u32 %s253, 1
          %s893 = smul.addr %s892, 8
          %s894 = scalar_lea.vmem [#allocation10], %s893
          %896 = dma.done %s891, 128
        $region88: #{tpu_custom_call.1} parent=83 // pred_fallthru
          _
      $region84: #{tpu_custom_call.1} parent=5 // pred_fallthru
        _
    $region6: #{tpu_custom_call.1} parent=1 // loop_footer
      %s28 = sadd.s32 1, %s24
    $region7: #{tpu_custom_call.1} parent=1 // loop_footer_branch
      %23 = sbr.rel target = $region3
    $region8: #{tpu_custom_call.1} parent=1 // loop_exit
      _
    %897 = vsyncpa [#allocation3], 1
    %s898 = scalar_lea.sflag [#allocation3], 1
    %899 = vsyncpa %s898, 1
    %900 = vsyncpa [#allocation6], 1
    %901 = vsyncpa [#allocation9], 1
    %902 = vsyncpa [#allocation4], 1
    %s903 = scalar_lea.sflag [#allocation4], 1
    %904 = vsyncpa %s903, 1

</llo_original>
